<compile_context>
chip_gen: v7x
topology: tpu7x:2x2x1
jax: 0.10.0
libtpu: 0.0.40
codegen_flags: <defaults>
</compile_context>

<pallas_src>
import functools

import jax
import jax.numpy as jnp
from jax.experimental import pallas as pl
from jax.experimental.pallas import tpu as pltpu


def _avgpool_images_kernel(x_ref, o_ref, *, n, inv_n):
    # x_ref: (TB, N, F) tile; o_ref: (TB, F). Mean over axis 1 (the images axis).
    if n <= 32:
        # Unrolled VPU adds over (TB, F) planes; f32 accumulation.
        acc = x_ref[:, 0, :].astype(jnp.float32)
        for i in range(1, n):
            acc = acc + x_ref[:, i, :].astype(jnp.float32)
    else:
        acc = jnp.sum(x_ref[...].astype(jnp.float32), axis=1)
    o_ref[...] = (acc * jnp.float32(inv_n)).astype(o_ref.dtype)


def _pick_tb(B, N, F, itemsize, vmem_budget_bytes):
    """Rows (batch elements) per grid step, sized for VMEM + sublane density."""
    # Per batch row, double-buffered input + double-buffered output bytes.
    per_row = (2 * N * F + 2 * F) * itemsize
    tb = max(1, vmem_budget_bytes // per_row)
    if tb >= 8:
        tb = (tb // 8) * 8  # sublane-dense (TB, F) writeback blocks
    if tb < 8:
        # Output block sublane dim must be a multiple of 8 or equal the full B.
        tb = min(8, B)
    if tb >= B:
        if B >= 16:
            # Split into >=2 grid steps so megacore (v7x 2-TC) sharding has work.
            half = -(-B // 2)
            tb = min(B, ((half + 7) // 8) * 8)
        else:
            tb = B
    return int(tb)


def avg_pool_images(x, *, vmem_budget_bytes=24 * 1024 * 1024):
    """x: (B, N, F) array. Returns (B, F) = mean over the N (images) axis."""
    B, N, F = x.shape
    itemsize = jnp.dtype(x.dtype).itemsize
    TB = _pick_tb(B, N, F, itemsize, vmem_budget_bytes)
    grid_b = pl.cdiv(B, TB)
    inv_n = 1.0 / float(N)  # AvgPool1d divides by kernel_size == N

    kernel = functools.partial(_avgpool_images_kernel, n=N, inv_n=inv_n)

    # Explicit scoped-VMEM limit: raises v5e's 16 MiB default, stays well under
    # v7x's 64 MiB physical VMEM.
    footprint = 2 * TB * N * F * itemsize + 2 * TB * F * itemsize
    vmem_limit = int(min(64 * 1024 * 1024, max(32 * 1024 * 1024, footprint * 5 // 4)))

    return pl.pallas_call(
        kernel,
        out_shape=jax.ShapeDtypeStruct((B, F), x.dtype),
        grid_spec=pltpu.PrefetchScalarGridSpec(
            num_scalar_prefetch=0,
            grid=(grid_b,),
            in_specs=[pl.BlockSpec((TB, N, F), lambda b: (b, 0, 0))],
            out_specs=pl.BlockSpec((TB, F), lambda b: (b, 0)),
        ),
        compiler_params=pltpu.CompilerParams(
            dimension_semantics=("parallel",),
            vmem_limit_bytes=vmem_limit,
        ),
    )(x)


if __name__ == "__main__":
    key = jax.random.PRNGKey(0)

    # Module-consistent small shapes: batch=2, nbr_images=12, features=128 (f32).
    B, N, F = 2, 12, 128
    x = jax.random.normal(key, (B, N, F), dtype=jnp.float32)
    out = jax.block_until_ready(avg_pool_images(x))
    ref = jnp.mean(x, axis=1)
    assert out.shape == (B, F)
    assert jnp.allclose(out, ref, atol=1e-5, rtol=1e-5), "f32 mismatch vs reference"

    # Secondary check: bf16 input, B=16 exercises the TB=8 tiled path (2 grid steps)
    # and the f32-accumulation path.
    B2 = 16
    x2 = jax.random.normal(jax.random.PRNGKey(1), (B2, N, F), dtype=jnp.bfloat16)
    out2 = jax.block_until_ready(avg_pool_images(x2))
    ref2 = jnp.mean(x2.astype(jnp.float32), axis=1).astype(jnp.bfloat16)
    assert out2.shape == (B2, F)
    assert jnp.allclose(
        out2.astype(jnp.float32), ref2.astype(jnp.float32), atol=2e-2, rtol=2e-2
    ), "bf16 mismatch vs reference"

    print("KERNEL_OK")
</pallas_src>

<mosaic_0001>
module attributes {stable_mosaic.version = 11 : i64} {
  func.func @_avgpool_images_kernel(%arg0: i32, %arg1: memref<2x12x128xf32, #tpu.memory_space<vmem>>, %arg2: memref<2x128xf32, #tpu.memory_space<vmem>>) attributes {dimension_semantics = [#tpu.dimension_semantics<parallel>], iteration_bounds = array<i64: 1>, scalar_prefetch = 0 : i64, scratch_operands = 0 : i64, tpu.core_type = #tpu.core_type<tc>, window_params = [{transform_indices = @transform_0, window_bounds = array<i64: 2, 12, 128>}, {transform_indices = @transform_1, window_bounds = array<i64: 2, 128>}]} {
    %c0 = arith.constant 0 : index
    %c0_0 = arith.constant 0 : index
    %c0_1 = arith.constant 0 : index
    %0 = vector.load %arg1[%c0, %c0_0, %c0_1] : memref<2x12x128xf32, #tpu.memory_space<vmem>>, vector<2x1x128xf32>
    %1 = vector.shape_cast %0 : vector<2x1x128xf32> to vector<2x128xf32>
    %c0_2 = arith.constant 0 : index
    %c1 = arith.constant 1 : index
    %c0_3 = arith.constant 0 : index
    %2 = vector.load %arg1[%c0_2, %c1, %c0_3] : memref<2x12x128xf32, #tpu.memory_space<vmem>>, vector<2x1x128xf32>
    %3 = vector.shape_cast %2 : vector<2x1x128xf32> to vector<2x128xf32>
    %4 = arith.addf %1, %3 : vector<2x128xf32>
    %c0_4 = arith.constant 0 : index
    %c2 = arith.constant 2 : index
    %c0_5 = arith.constant 0 : index
    %5 = vector.load %arg1[%c0_4, %c2, %c0_5] : memref<2x12x128xf32, #tpu.memory_space<vmem>>, vector<2x1x128xf32>
    %6 = vector.shape_cast %5 : vector<2x1x128xf32> to vector<2x128xf32>
    %7 = arith.addf %4, %6 : vector<2x128xf32>
    %c0_6 = arith.constant 0 : index
    %c3 = arith.constant 3 : index
    %c0_7 = arith.constant 0 : index
    %8 = vector.load %arg1[%c0_6, %c3, %c0_7] : memref<2x12x128xf32, #tpu.memory_space<vmem>>, vector<2x1x128xf32>
    %9 = vector.shape_cast %8 : vector<2x1x128xf32> to vector<2x128xf32>
    %10 = arith.addf %7, %9 : vector<2x128xf32>
    %c0_8 = arith.constant 0 : index
    %c4 = arith.constant 4 : index
    %c0_9 = arith.constant 0 : index
    %11 = vector.load %arg1[%c0_8, %c4, %c0_9] : memref<2x12x128xf32, #tpu.memory_space<vmem>>, vector<2x1x128xf32>
    %12 = vector.shape_cast %11 : vector<2x1x128xf32> to vector<2x128xf32>
    %13 = arith.addf %10, %12 : vector<2x128xf32>
    %c0_10 = arith.constant 0 : index
    %c5 = arith.constant 5 : index
    %c0_11 = arith.constant 0 : index
    %14 = vector.load %arg1[%c0_10, %c5, %c0_11] : memref<2x12x128xf32, #tpu.memory_space<vmem>>, vector<2x1x128xf32>
    %15 = vector.shape_cast %14 : vector<2x1x128xf32> to vector<2x128xf32>
    %16 = arith.addf %13, %15 : vector<2x128xf32>
    %c0_12 = arith.constant 0 : index
    %c6 = arith.constant 6 : index
    %c0_13 = arith.constant 0 : index
    %17 = vector.load %arg1[%c0_12, %c6, %c0_13] : memref<2x12x128xf32, #tpu.memory_space<vmem>>, vector<2x1x128xf32>
    %18 = vector.shape_cast %17 : vector<2x1x128xf32> to vector<2x128xf32>
    %19 = arith.addf %16, %18 : vector<2x128xf32>
    %c0_14 = arith.constant 0 : index
    %c7 = arith.constant 7 : index
    %c0_15 = arith.constant 0 : index
    %20 = vector.load %arg1[%c0_14, %c7, %c0_15] : memref<2x12x128xf32, #tpu.memory_space<vmem>>, vector<2x1x128xf32>
    %21 = vector.shape_cast %20 : vector<2x1x128xf32> to vector<2x128xf32>
    %22 = arith.addf %19, %21 : vector<2x128xf32>
    %c0_16 = arith.constant 0 : index
    %c8 = arith.constant 8 : index
    %c0_17 = arith.constant 0 : index
    %23 = vector.load %arg1[%c0_16, %c8, %c0_17] : memref<2x12x128xf32, #tpu.memory_space<vmem>>, vector<2x1x128xf32>
    %24 = vector.shape_cast %23 : vector<2x1x128xf32> to vector<2x128xf32>
    %25 = arith.addf %22, %24 : vector<2x128xf32>
    %c0_18 = arith.constant 0 : index
    %c9 = arith.constant 9 : index
    %c0_19 = arith.constant 0 : index
    %26 = vector.load %arg1[%c0_18, %c9, %c0_19] : memref<2x12x128xf32, #tpu.memory_space<vmem>>, vector<2x1x128xf32>
    %27 = vector.shape_cast %26 : vector<2x1x128xf32> to vector<2x128xf32>
    %28 = arith.addf %25, %27 : vector<2x128xf32>
    %c0_20 = arith.constant 0 : index
    %c10 = arith.constant 10 : index
    %c0_21 = arith.constant 0 : index
    %29 = vector.load %arg1[%c0_20, %c10, %c0_21] : memref<2x12x128xf32, #tpu.memory_space<vmem>>, vector<2x1x128xf32>
    %30 = vector.shape_cast %29 : vector<2x1x128xf32> to vector<2x128xf32>
    %31 = arith.addf %28, %30 : vector<2x128xf32>
    %c0_22 = arith.constant 0 : index
    %c11 = arith.constant 11 : index
    %c0_23 = arith.constant 0 : index
    %32 = vector.load %arg1[%c0_22, %c11, %c0_23] : memref<2x12x128xf32, #tpu.memory_space<vmem>>, vector<2x1x128xf32>
    %33 = vector.shape_cast %32 : vector<2x1x128xf32> to vector<2x128xf32>
    %34 = arith.addf %31, %33 : vector<2x128xf32>
    %cst = arith.constant 0.0833333358 : f32
    %35 = vector.broadcast %cst : f32 to vector<2x128xf32>
    %36 = arith.mulf %34, %35 : vector<2x128xf32>
    %c0_24 = arith.constant 0 : index
    %c0_25 = arith.constant 0 : index
    %37 = vector.load %arg2[%c0_24, %c0_25] : memref<2x128xf32, #tpu.memory_space<vmem>>, vector<2x128xf32>
    tpu.vector_store %arg2[%c0_24, %c0_25], %36 {strides = array<i32>} : memref<2x128xf32, #tpu.memory_space<vmem>>, vector<2x128xf32>,
    return
  }
  func.func @transform_0(%arg0: i32) -> (i32, i32, i32) {
    %c0_i32 = arith.constant 0 : i32
    %c0_i32_0 = arith.constant 0 : i32
    %c0_i32_1 = arith.constant 0 : i32
    return %arg0, %c0_i32, %c0_i32_0 : i32, i32, i32
  }
  func.func @transform_1(%arg0: i32) -> (i32, i32) {
    %c0_i32 = arith.constant 0 : i32
    %c0_i32_0 = arith.constant 0 : i32
    return %arg0, %c0_i32 : i32, i32
  }
}

</mosaic_0001>

<llo_original>
// kernel: tpu_custom_call.1
$region0: #{tpu_custom_call.1}
  #allocation0 [shape = 'u32[]', space=smem, size = 0x4, offset = 0x4, fixed_abs, tag = 'smem constant byte address 0x4 - core index']
  #allocation1 [shape = 'u32[144,128]{1,0:T(1,128)}', space=vmem, size = 0x12000, scoped, tag = 'internal scratch']
  %s0 = inlined_call_operand.vmem [shape: f32[2,12,128], index: 0, kind: input, shape index: {}]
  %s1 = inlined_call_operand.hbm [shape: f32[2,128], index: 1, kind: output, shape index: {}]
  %s2 = sld [smem:[#allocation0]]
  $region14: #{tpu_custom_call.1} parent=0
    _
  %s4 = ssub.s32 1, %s2
  %s5 = scalar_select 0, %s4, %s2
  $region1: #{tpu_custom_call.1} parent=0
    #allocation2 [shape = 'u8[1024]{0}', space=vmem, size = 0x400, scoped, tag = 'output window, operand 0, single buffered']
    #allocation3 [shape = 's32[1]{0}', space=sflag, size = 0x4, scoped, tag = 'scoped memory for tpu_custom_call.1']
    %6 = vsyncpa [#allocation3], 0
    // Predicated region
    $region2: #{tpu_custom_call.1} parent=1 // pred_check
      _
    $region3: #{tpu_custom_call.1} parent=1 // pred_check_branch
      %8 = sbr.rel (0) target = $region5
    $region4: #{tpu_custom_call.1} parent=1 // pred_region
      _
    $region5: #{tpu_custom_call.1} parent=1 // pred_fallthru
      _
    %v9 = vld [vmem:[%s0] sm:$0x1]
    %v10 = vld [vmem:[%s0 + $0x10] sm:$0x1]
    %v11 = vld [vmem:[%s0 + $0x1] sm:$0x1]
    %v12 = vld [vmem:[%s0 + $0x11] sm:$0x1]
    %v13 = vadd.f32 %v9, %v11
    %v14 = vadd.f32 %v10, %v12
    %v15 = vld [vmem:[%s0 + $0x2] sm:$0x1]
    %v16 = vld [vmem:[%s0 + $0x12] sm:$0x1]
    %v17 = vadd.f32 %v13, %v15
    %v18 = vadd.f32 %v14, %v16
    %v19 = vld [vmem:[%s0 + $0x3] sm:$0x1]
    %v20 = vld [vmem:[%s0 + $0x13] sm:$0x1]
    %v21 = vadd.f32 %v17, %v19
    %v22 = vadd.f32 %v18, %v20
    %v23 = vld [vmem:[%s0 + $0x4] sm:$0x1]
    %v24 = vld [vmem:[%s0 + $0x14] sm:$0x1]
    %v25 = vadd.f32 %v21, %v23
    %v26 = vadd.f32 %v22, %v24
    %v27 = vld [vmem:[%s0 + $0x5] sm:$0x1]
    %v28 = vld [vmem:[%s0 + $0x15] sm:$0x1]
    %v29 = vadd.f32 %v25, %v27
    %v30 = vadd.f32 %v26, %v28
    %v31 = vld [vmem:[%s0 + $0x6] sm:$0x1]
    %v32 = vld [vmem:[%s0 + $0x16] sm:$0x1]
    %v33 = vadd.f32 %v29, %v31
    %v34 = vadd.f32 %v30, %v32
    %v35 = vld [vmem:[%s0 + $0x7] sm:$0x1]
    %v36 = vld [vmem:[%s0 + $0x17] sm:$0x1]
    %v37 = vadd.f32 %v33, %v35
    %v38 = vadd.f32 %v34, %v36
    %v39 = vld [vmem:[%s0 + $0x8] sm:$0x1]
    %v40 = vld [vmem:[%s0 + $0x18] sm:$0x1]
    %v41 = vadd.f32 %v37, %v39
    %v42 = vadd.f32 %v38, %v40
    %v43 = vld [vmem:[%s0 + $0x9] sm:$0x1]
    %v44 = vld [vmem:[%s0 + $0x19] sm:$0x1]
    %v45 = vadd.f32 %v41, %v43
    %v46 = vadd.f32 %v42, %v44
    %v47 = vld [vmem:[%s0 + $0xa] sm:$0x1]
    %v48 = vld [vmem:[%s0 + $0x1a] sm:$0x1]
    %v49 = vadd.f32 %v45, %v47
    %v50 = vadd.f32 %v46, %v48
    %v51 = vld [vmem:[%s0 + $0xb] sm:$0x1]
    %v52 = vld [vmem:[%s0 + $0x1b] sm:$0x1]
    %v53 = vadd.f32 %v49, %v51
    %v54 = vadd.f32 %v50, %v52
    %v55 = vmul.f32 %v53, 0.083333336
    %v56 = vmul.f32 %v54, 0.083333336
    %v59 = vrot.slane %v56, 7
    %vm60 = vcmask 1041409
    %v61 = vsel %vm60, %v59, %v55
    %63 = vst [vmem:[#allocation2] sm:$0x3] %v61
    // Predicated region
    $region6: #{tpu_custom_call.1} parent=1 // pred_check
      _
    $region7: #{tpu_custom_call.1} parent=1 // pred_check_branch
      %65 = sbr.rel (0) target = $region9
    $region8: #{tpu_custom_call.1} parent=1 // pred_region
      %s67 = ssub.s32 32, 32
      %68 = vsyncadd [#allocation3], %s67
      %s70 = sshll.u32 [#allocation2], 4
      %s71 = int_to_ptr.vmem [resolvable:$true] %s70
      %73 = dma.vmem_to_hbm [thread:$0]  %s71, 32, %s1, [#allocation3]
    $region9: #{tpu_custom_call.1} parent=1 // pred_fallthru
      _
    // Predicated region
    $region10: #{tpu_custom_call.1} parent=1 // pred_check
      _
    $region11: #{tpu_custom_call.1} parent=1 // pred_check_branch
      %75 = sbr.rel (0) target = $region13
    $region12: #{tpu_custom_call.1} parent=1 // pred_region
      %76 = dma.done [#allocation3], 32
    $region13: #{tpu_custom_call.1} parent=1 // pred_fallthru
      _
    %77 = vsyncpa [#allocation3], 1

</llo_original>
